<compile_context>
chip_gen: v7x
topology: tpu7x:2x2x1
jax: 0.10.0
libtpu: 0.0.40
codegen_flags: <defaults>
</compile_context>

<pallas_src>
import math

import jax
import jax.numpy as jnp
from jax.experimental import pallas as pl
from jax.experimental.pallas import tpu as pltpu

OMEGA = 10.0
EPSILON = 2.0
INV_EPSILON = 1.0 / EPSILON
# C = omega - omega * log(1 + omega / epsilon)   (compile-time constant)
C_CONST = OMEGA - OMEGA * math.log(1.0 + OMEGA / EPSILON)

LANES = 512          # lane-dense last dim (multiple of 128)
MAX_TILE_ROWS = 512  # 512x512 f32 = 1 MiB per input tile; 2 in x 2 bufs = 4 MiB


def _round_up(x: int, m: int) -> int:
    return ((x + m - 1) // m) * m


def _wing_loss_kernel(pred_ref, target_ref, psum_ref):
    # Elementwise piecewise wing loss on one (tile_rows, LANES) tile,
    # reduced to an (8, LANES) per-tile partial sum (VALU-only reduction:
    # the sublane/lane collapse happens once, outside the kernel).
    pred = pred_ref[...].astype(jnp.float32)
    target = target_ref[...].astype(jnp.float32)
    delta = jnp.abs(target - pred)

    loss_small = OMEGA * jnp.log1p(delta * INV_EPSILON)   # branch: delta < omega
    loss_large = delta - C_CONST                          # branch: delta >= omega
    loss = jnp.where(delta < OMEGA, loss_small, loss_large)

    tr, lanes = loss.shape
    # (tr, lanes) -> (tr//8, 8, lanes): splits the sublane-major axis only,
    # so the add-reduce over axis 0 is plain vreg adds (no XLU traffic).
    psum_ref[...] = jnp.sum(loss.reshape(tr // 8, 8, lanes), axis=0)


def wing_loss(pred: jax.Array, target: jax.Array) -> jax.Array:
    """Pallas TPU wing loss. pred/target: same shape (e.g. (B, 30)). Returns scalar f32."""
    assert pred.shape == target.shape
    n_true = pred.size
    assert n_true > 0

    # --- lane-dense, tile-aligned layout ------------------------------------
    rows = pl.cdiv(n_true, LANES)
    tile_rows = min(MAX_TILE_ROWS, _round_up(rows, 8))   # multiple of 8
    total_rows = _round_up(rows, tile_rows)
    padded_total = total_rows * LANES
    num_tiles = total_rows // tile_rows

    def to_lane_dense(x):
        x = jnp.ravel(x)
        x = jnp.pad(x, (0, padded_total - n_true))        # zero pad -> 0 loss
        return x.reshape(total_rows, LANES)

    p2 = to_lane_dense(pred)
    t2 = to_lane_dense(target)

    # --- tiled, pipelined, parallel partial-sum kernel ----------------------
    partials = pl.pallas_call(
        _wing_loss_kernel,
        out_shape=jax.ShapeDtypeStruct((num_tiles * 8, LANES), jnp.float32),
        grid=(num_tiles,),
        in_specs=[
            pl.BlockSpec((tile_rows, LANES), lambda i: (i, 0)),
            pl.BlockSpec((tile_rows, LANES), lambda i: (i, 0)),
        ],
        out_specs=pl.BlockSpec((8, LANES), lambda i: (i, 0)),
        compiler_params=pltpu.CompilerParams(
            dimension_semantics=("parallel",),   # no carried state across tiles
            vmem_limit_bytes=64 << 20,
        ),
    )(p2, t2)

    # Tiny final reduction + mean over the TRUE element count (len1+len2 == n_true).
    return jnp.sum(partials) * (1.0 / n_true)


def _reference(pred, target):
    d = jnp.abs(target.astype(jnp.float32) - pred.astype(jnp.float32))
    return jnp.mean(jnp.where(d < OMEGA, OMEGA * jnp.log1p(d / EPSILON), d - C_CONST))


if __name__ == "__main__":
    key = jax.random.PRNGKey(0)

    # Case 1: the literal Bx30 landmark shape from the PyTorch docstring.
    k1, k2, k3, k4 = jax.random.split(key, 4)
    B, L = 2, 30
    # Spread values so both branches (|d| < omega and |d| >= omega) are hit.
    pred_s = jax.random.normal(k1, (B, L), dtype=jnp.float32) * 8.0
    target_s = jax.random.normal(k2, (B, L), dtype=jnp.float32) * 8.0
    loss_s = wing_loss(pred_s, target_s)
    jax.block_until_ready(loss_s)
    ref_s = _reference(pred_s, target_s)
    assert jnp.allclose(loss_s, ref_s, rtol=1e-5, atol=1e-5), (loss_s, ref_s)

    # Case 2: a larger shape that exercises the multi-tile parallel grid.
    B2, L2 = 4096, 384  # 1.57M elements -> 3072 rows -> 6 tiles of 512 rows
    pred_l = jax.random.normal(k3, (B2, L2), dtype=jnp.float32) * 8.0
    target_l = jax.random.normal(k4, (B2, L2), dtype=jnp.float32) * 8.0
    loss_l = wing_loss(pred_l, target_l)
    jax.block_until_ready(loss_l)
    ref_l = _reference(pred_l, target_l)
    assert jnp.allclose(loss_l, ref_l, rtol=1e-5, atol=1e-5), (loss_l, ref_l)

    print("KERNEL_OK")
</pallas_src>

<mosaic_0001>
module attributes {stable_mosaic.version = 11 : i64} {
  func.func @_wing_loss_kernel(%arg0: i32, %arg1: memref<8x512xf32, #tpu.memory_space<vmem>>, %arg2: memref<8x512xf32, #tpu.memory_space<vmem>>, %arg3: memref<8x512xf32, #tpu.memory_space<vmem>>) attributes {dimension_semantics = [#tpu.dimension_semantics<parallel>], iteration_bounds = array<i64: 1>, scalar_prefetch = 0 : i64, scratch_operands = 0 : i64, tpu.core_type = #tpu.core_type<tc>, window_params = [{transform_indices = @transform_0, window_bounds = array<i64: 8, 512>}, {transform_indices = @transform_1, window_bounds = array<i64: 8, 512>}, {transform_indices = @transform_2, window_bounds = array<i64: 8, 512>}]} {
    %c0 = arith.constant 0 : index
    %c0_0 = arith.constant 0 : index
    %0 = vector.load %arg1[%c0, %c0_0] : memref<8x512xf32, #tpu.memory_space<vmem>>, vector<8x512xf32>
    %c0_1 = arith.constant 0 : index
    %c0_2 = arith.constant 0 : index
    %1 = vector.load %arg2[%c0_1, %c0_2] : memref<8x512xf32, #tpu.memory_space<vmem>>, vector<8x512xf32>
    %2 = arith.subf %1, %0 : vector<8x512xf32>
    %3 = math.absf %2 : vector<8x512xf32>
    %cst = arith.constant 5.000000e-01 : f32
    %4 = vector.broadcast %cst : f32 to vector<8x512xf32>
    %5 = arith.mulf %3, %4 : vector<8x512xf32>
    %6 = math.log1p %5 : vector<8x512xf32>
    %cst_3 = arith.constant 1.000000e+01 : f32
    %7 = vector.broadcast %cst_3 : f32 to vector<8x512xf32>
    %8 = arith.mulf %7, %6 : vector<8x512xf32>
    %cst_4 = arith.constant -7.9175949 : f32
    %9 = vector.broadcast %cst_4 : f32 to vector<8x512xf32>
    %10 = arith.subf %3, %9 : vector<8x512xf32>
    %cst_5 = arith.constant 1.000000e+01 : f32
    %11 = vector.broadcast %cst_5 : f32 to vector<8x512xf32>
    %12 = arith.cmpf olt, %3, %11 : vector<8x512xf32>
    %13 = arith.select %12, %8, %10 : vector<8x512xi1>, vector<8x512xf32>
    %14 = vector.shape_cast %13 : vector<8x512xf32> to vector<1x8x512xf32>
    %cst_6 = arith.constant dense<0.000000e+00> : vector<8x512xf32>
    %15 = vector.multi_reduction <add>, %14, %cst_6 [0] : vector<1x8x512xf32> to vector<8x512xf32>
    %c0_7 = arith.constant 0 : index
    %c0_8 = arith.constant 0 : index
    %16 = vector.load %arg3[%c0_7, %c0_8] : memref<8x512xf32, #tpu.memory_space<vmem>>, vector<8x512xf32>
    tpu.vector_store %arg3[%c0_7, %c0_8], %15 {strides = array<i32>} : memref<8x512xf32, #tpu.memory_space<vmem>>, vector<8x512xf32>,
    return
  }
  func.func @transform_0(%arg0: i32) -> (i32, i32) {
    %c0_i32 = arith.constant 0 : i32
    %c0_i32_0 = arith.constant 0 : i32
    return %arg0, %c0_i32 : i32, i32
  }
  func.func @transform_1(%arg0: i32) -> (i32, i32) {
    %c0_i32 = arith.constant 0 : i32
    %c0_i32_0 = arith.constant 0 : i32
    return %arg0, %c0_i32 : i32, i32
  }
  func.func @transform_2(%arg0: i32) -> (i32, i32) {
    %c0_i32 = arith.constant 0 : i32
    %c0_i32_0 = arith.constant 0 : i32
    return %arg0, %c0_i32 : i32, i32
  }
}

</mosaic_0001>

<llo_original>
// kernel: tpu_custom_call.1
$region0: #{tpu_custom_call.1}
  #allocation0 [shape = 'u32[]', space=smem, size = 0x4, offset = 0x4, fixed_abs, tag = 'smem constant byte address 0x4 - core index']
  #allocation1 [shape = 'u32[144,128]{1,0:T(1,128)}', space=vmem, size = 0x12000, scoped, tag = 'internal scratch']
  %s0 = inlined_call_operand.hbm [shape: f32[8,512], index: 0, kind: input, shape index: {}]
  %s1 = inlined_call_operand.hbm [shape: f32[8,512], index: 1, kind: input, shape index: {}]
  %s2 = inlined_call_operand.hbm [shape: f32[8,512], index: 2, kind: output, shape index: {}]
  %s3 = sld [smem:[#allocation0]]
  $region26: #{tpu_custom_call.1} parent=0
    _
  %s5 = ssub.s32 1, %s3
  %s6 = scalar_select 0, %s5, %s3
  $region1: #{tpu_custom_call.1} parent=0
    #allocation2 [shape = 'u8[16384]{0}', space=vmem, size = 0x4000, scoped, tag = 'input window, operand 0, single buffered']
    #allocation3 [shape = 's32[1]{0}', space=sflag, size = 0x4, scoped, tag = 'scoped memory for tpu_custom_call.1']
    #allocation4 [shape = 's32[1]{0}', space=sflag, size = 0x4, scoped, tag = 'scoped memory for tpu_custom_call.1']
    #allocation5 [shape = 'u8[16384]{0}', space=vmem, size = 0x4000, scoped, tag = 'input window, operand 1, single buffered']
    #allocation6 [shape = 's32[1]{0}', space=sflag, size = 0x4, scoped, tag = 'scoped memory for tpu_custom_call.1']
    #allocation7 [shape = 'u8[16384]{0}', space=vmem, size = 0x4000, scoped, tag = 'output window, operand 0, single buffered']
    %7 = vsyncpa [#allocation3], 0
    %8 = vsyncpa [#allocation6], 0
    %9 = vsyncpa [#allocation4], 0
    // Predicated region
    $region2: #{tpu_custom_call.1} parent=1 // pred_check
      _
    $region3: #{tpu_custom_call.1} parent=1 // pred_check_branch
      %11 = sbr.rel (0) target = $region5
    $region4: #{tpu_custom_call.1} parent=1 // pred_region
      %s13 = ssub.s32 512, 512
      %14 = vsyncadd [#allocation3], %s13
      %s16 = sshll.u32 [#allocation2], 4
      %s17 = int_to_ptr.vmem [resolvable:$true] %s16
      %19 = dma.hbm_to_vmem [thread:$0]  %s0, 512, %s17, [#allocation3]
    $region5: #{tpu_custom_call.1} parent=1 // pred_fallthru
      _
    // Predicated region
    $region6: #{tpu_custom_call.1} parent=1 // pred_check
      _
    $region7: #{tpu_custom_call.1} parent=1 // pred_check_branch
      %21 = sbr.rel (0) target = $region9
    $region8: #{tpu_custom_call.1} parent=1 // pred_region
      %s23 = ssub.s32 512, 512
      %24 = vsyncadd [#allocation6], %s23
      %s26 = sshll.u32 [#allocation5], 4
      %s27 = int_to_ptr.vmem [resolvable:$true] %s26
      %29 = dma.hbm_to_vmem [thread:$0]  %s1, 512, %s27, [#allocation6]
    $region9: #{tpu_custom_call.1} parent=1 // pred_fallthru
      _
    // Predicated region
    $region10: #{tpu_custom_call.1} parent=1 // pred_check
      _
    $region11: #{tpu_custom_call.1} parent=1 // pred_check_branch
      %31 = sbr.rel (0) target = $region13
    $region12: #{tpu_custom_call.1} parent=1 // pred_region
      %32 = dma.done [#allocation3], 512
    $region13: #{tpu_custom_call.1} parent=1 // pred_fallthru
      _
    // Predicated region
    $region14: #{tpu_custom_call.1} parent=1 // pred_check
      _
    $region15: #{tpu_custom_call.1} parent=1 // pred_check_branch
      %34 = sbr.rel (0) target = $region17
    $region16: #{tpu_custom_call.1} parent=1 // pred_region
      %35 = dma.done [#allocation6], 512
    $region17: #{tpu_custom_call.1} parent=1 // pred_fallthru
      _
    %v36 = vld [vmem:[#allocation2] sm:$0xff]
    %v37 = vld [vmem:[#allocation2 + $0x8] sm:$0xff]
    %v38 = vld [vmem:[#allocation2 + $0x10] sm:$0xff]
    %v39 = vld [vmem:[#allocation2 + $0x18] sm:$0xff]
    %v40 = vld [vmem:[#allocation5] sm:$0xff]
    %v41 = vld [vmem:[#allocation5 + $0x8] sm:$0xff]
    %v42 = vld [vmem:[#allocation5 + $0x10] sm:$0xff]
    %v43 = vld [vmem:[#allocation5 + $0x18] sm:$0xff]
    %v44 = vsub.f32 %v40, %v36
    %v45 = vsub.f32 %v41, %v37
    %v46 = vsub.f32 %v42, %v38
    %v47 = vsub.f32 %v43, %v39
    %v48 = vand.u32 2147483647, %v44
    %v49 = vand.u32 2147483647, %v45
    %v50 = vand.u32 2147483647, %v46
    %v51 = vand.u32 2147483647, %v47
    %v52 = vmul.f32 %v48, 0.5
    %v53 = vmul.f32 %v49, 0.5
    %v54 = vmul.f32 %v50, 0.5
    %v55 = vmul.f32 %v51, 0.5
    %v56 = vadd.f32 %v52, 1.0
    %v57 = vlog2.pop %v56
    %v58 = vmul.f32 %v57, 0.6931472
    %v59 = vmul.f32 -0.5, %v52
    %v60 = vadd.f32 %v59, 1.0
    %v61 = vmul.f32 %v60, %v52
    %v62 = vand.u32 2147483647, %v52
    %vm63 = vcmp.lt.f32.partialorder %v62, 0.0004427343
    %v64 = vsel %vm63, %v61, %v58
    %v65 = vadd.f32 %v53, 1.0
    %v66 = vlog2.pop %v65
    %v67 = vmul.f32 %v66, 0.6931472
    %v68 = vmul.f32 -0.5, %v53
    %v69 = vadd.f32 %v68, 1.0
    %v70 = vmul.f32 %v69, %v53
    %v71 = vand.u32 2147483647, %v53
    %vm72 = vcmp.lt.f32.partialorder %v71, 0.0004427343
    %v73 = vsel %vm72, %v70, %v67
    %v74 = vadd.f32 %v54, 1.0
    %v75 = vlog2.pop %v74
    %v76 = vmul.f32 %v75, 0.6931472
    %v77 = vmul.f32 -0.5, %v54
    %v78 = vadd.f32 %v77, 1.0
    %v79 = vmul.f32 %v78, %v54
    %v80 = vand.u32 2147483647, %v54
    %vm81 = vcmp.lt.f32.partialorder %v80, 0.0004427343
    %v82 = vsel %vm81, %v79, %v76
    %v83 = vadd.f32 %v55, 1.0
    %v84 = vlog2.pop %v83
    %v85 = vmul.f32 %v84, 0.6931472
    %v86 = vmul.f32 -0.5, %v55
    %v87 = vadd.f32 %v86, 1.0
    %v88 = vmul.f32 %v87, %v55
    %v89 = vand.u32 2147483647, %v55
    %vm90 = vcmp.lt.f32.partialorder %v89, 0.0004427343
    %v91 = vsel %vm90, %v88, %v85
    %v92 = vmul.f32 %v64, 10.0
    %v93 = vmul.f32 %v73, 10.0
    %v94 = vmul.f32 %v82, 10.0
    %v95 = vmul.f32 %v91, 10.0
    %v96 = vsub.f32 %v48, -7.917595
    %v97 = vsub.f32 %v49, -7.917595
    %v98 = vsub.f32 %v50, -7.917595
    %v99 = vsub.f32 %v51, -7.917595
    %vm100 = vcmp.lt.f32.partialorder %v48, 10.0
    %vm101 = vcmp.lt.f32.partialorder %v49, 10.0
    %vm102 = vcmp.lt.f32.partialorder %v50, 10.0
    %vm103 = vcmp.lt.f32.partialorder %v51, 10.0
    %v104 = vsel %vm100, %v92, %v96
    %v105 = vsel %vm101, %v93, %v97
    %v106 = vsel %vm102, %v94, %v98
    %v107 = vsel %vm103, %v95, %v99
    %v108 = vadd.f32 %v104, 0.0
    %v109 = vadd.f32 %v105, 0.0
    %v110 = vadd.f32 %v106, 0.0
    %v111 = vadd.f32 %v107, 0.0
    %112 = vst [vmem:[#allocation7] sm:$0xff] %v108
    %113 = vst [vmem:[#allocation7 + $0x8] sm:$0xff] %v109
    %114 = vst [vmem:[#allocation7 + $0x10] sm:$0xff] %v110
    %115 = vst [vmem:[#allocation7 + $0x18] sm:$0xff] %v111
    // Predicated region
    $region18: #{tpu_custom_call.1} parent=1 // pred_check
      _
    $region19: #{tpu_custom_call.1} parent=1 // pred_check_branch
      %117 = sbr.rel (0) target = $region21
    $region20: #{tpu_custom_call.1} parent=1 // pred_region
      %s119 = ssub.s32 512, 512
      %120 = vsyncadd [#allocation4], %s119
      %s122 = sshll.u32 [#allocation7], 4
      %s123 = int_to_ptr.vmem [resolvable:$true] %s122
      %125 = dma.vmem_to_hbm [thread:$0]  %s123, 512, %s2, [#allocation4]
    $region21: #{tpu_custom_call.1} parent=1 // pred_fallthru
      _
    // Predicated region
    $region22: #{tpu_custom_call.1} parent=1 // pred_check
      _
    $region23: #{tpu_custom_call.1} parent=1 // pred_check_branch
      %127 = sbr.rel (0) target = $region25
    $region24: #{tpu_custom_call.1} parent=1 // pred_region
      %128 = dma.done [#allocation4], 512
    $region25: #{tpu_custom_call.1} parent=1 // pred_fallthru
      _
    %129 = vsyncpa [#allocation3], 1
    %130 = vsyncpa [#allocation6], 1
    %131 = vsyncpa [#allocation4], 1

</llo_original>
